<compile_context>
chip_gen: v6e
topology: v6e:2x2x1
jax: 0.10.0
libtpu: 0.0.40
codegen_flags: <defaults>
</compile_context>

<pallas_src>
import functools

import jax
import jax.numpy as jnp
from jax import lax
from jax.experimental import pallas as pl
from jax.experimental.pallas import tpu as pltpu


def _pick_tiling(H, W, k, itemsize):
    """Choose the flattened-output layout and spatial tile.

    Returns dict with:
      hwp        : length of the flattened (possibly padded) H*W output axis
      thw        : tile length along that axis (block last dim)
      whole_rows : True if every tile covers whole feature rows (no div/rem)
      th         : rows per tile (only meaningful when whole_rows)
    """
    HW = H * W
    R = 4 * k
    budget = 1 << 20            # ~1 MiB per output block: 2x-buffered output +
                                # scratch + f32 temps stay far under v5e's 16 MiB
                                # scoped default and v7x's 64 MiB VMEM.
    row_bytes = R * W * itemsize

    # Preferred: whole-row tiles whose flattened length is a multiple of 128
    # (full-width vst, no lane masking) and that fit the per-block budget.
    divs = [d for d in range(1, H + 1) if H % d == 0]
    aligned = [d for d in divs if (d * W) % 128 == 0 and d * row_bytes <= budget]
    if aligned:
        th = max(aligned)
        if th == H:
            # Force >=2 spatial tiles so the "parallel" axis can be split across
            # both v7x TensorCores (costs one ~0.35us pipeline step).
            smaller = [d for d in aligned if d < H]
            if smaller:
                th = max(smaller)
        return dict(hwp=HW, thw=th * W, whole_rows=True, th=th)

    # Small maps with awkward shapes: one bounded full-extent block.
    if H * row_bytes <= budget:
        return dict(hwp=HW, thw=HW, whole_rows=True, th=H)

    # Large awkward maps: pad the flattened axis so every block is lane-dense
    # and bounded; the wrapper slices the pad off.
    max_thw = max(128, (budget // (R * itemsize)) // 128 * 128)
    thw = min(max_thw, ((HW + 127) // 128) * 128)
    hwp = ((HW + thw - 1) // thw) * thw
    return dict(hwp=hwp, thw=thw, whole_rows=False, th=0)


def _make_anchors_kernel(wh_ref, out_ref, scratch_ref, *, x0, y0, sx, sy,
                         W, th, whole_rows, k, n_batch):
    """Grid point (t, n): spatial tile t, batch element n.

    wh_ref:      (4*k, 1) f32 VMEM; rows 4a+2 / 4a+3 hold anchor width / height.
    out_ref:     (1, 4*k, thw) output block (lane-dense flattened H*W).
    scratch_ref: (4*k, thw) VMEM; holds the slab computed at n == 0.
    """
    t = pl.program_id(0)
    n = pl.program_id(1)
    R = 4 * k
    thw = out_ref.shape[2]
    f32 = jnp.float32

    @pl.when(n == 0)
    def _():
        # --- spatial coordinates: computed once per tile at (1, thw) ---
        i = lax.broadcasted_iota(jnp.int32, (1, thw), 1)
        if whole_rows:
            if W & (W - 1) == 0:              # power-of-two W: shift/mask
                shift = W.bit_length() - 1
                rowl = i >> shift
                col = i & (W - 1)
            else:                             # one constant division, no rem
                rowl = i // W
                col = i - rowl * W
            rowg = rowl + t * th              # scalar row offset of this tile
        else:                                 # rare padded path (awkward HW)
            flat = i + t * thw
            rowg = flat // W
            col = flat - rowg * W
        xs = col.astype(f32) * sx + x0        # (1, thw)
        ys = rowg.astype(f32) * sy + y0       # (1, thw)

        # --- per-row plane masks at (R, 1); lane-broadcast only in the merge ---
        ridx = lax.broadcasted_iota(jnp.int32, (R, 1), 0)
        plane = ridx & 3                      # 0=xc, 1=yc, 2=w, 3=h
        vals = jnp.where(plane == 0, xs,
                         jnp.where(plane == 1, ys, wh_ref[...]))
        vals = vals.astype(out_ref.dtype)

        out_ref[0] = vals
        if n_batch > 1:
            scratch_ref[...] = vals           # reuse for remaining batch entries

    if n_batch > 1:
        @pl.when(n > 0)
        def _():
            out_ref[0] = scratch_ref[...]     # pure VMEM->VMEM copy


def make_anchors(x, anchors, x0, y0, sx, sy):
    """Pallas equivalent of MakeAnchors.forward.

    x:       (N, C, H, W)  -- only shape/dtype are used (matches PyTorch).
    anchors: (2, k)        -- anchors[0] = widths, anchors[1] = heights.
    returns: (N, 4*k, H, W), dtype of x.
    """
    N, _, H, W = x.shape
    k = anchors.shape[1]
    R = 4 * k
    HW = H * W
    itemsize = jnp.dtype(x.dtype).itemsize
    tl = _pick_tiling(H, W, k, itemsize)
    hwp, thw = tl["hwp"], tl["thw"]
    n_hw = hwp // thw

    # Tiny (4*k, 1) per-output-row width/height column: rows 4a+2 -> w_a,
    # rows 4a+3 -> h_a (rows 4a / 4a+1 are overridden by the xc/yc selects).
    anchors_f = anchors.astype(jnp.float32)
    zeros = jnp.zeros((k,), jnp.float32)
    wh_col = jnp.stack([zeros, zeros, anchors_f[0], anchors_f[1]], axis=1)
    wh_col = wh_col.reshape(R, 1)

    kernel = functools.partial(
        _make_anchors_kernel,
        x0=float(x0), y0=float(y0), sx=float(sx), sy=float(sy),
        W=W, th=tl["th"], whole_rows=tl["whole_rows"], k=k, n_batch=N)

    scratch_shape = (R, thw) if N > 1 else (8, 128)   # unused dummy when N == 1

    out = pl.pallas_call(
        kernel,
        out_shape=jax.ShapeDtypeStruct((N, R, hwp), x.dtype),
        grid_spec=pltpu.PrefetchScalarGridSpec(
            num_scalar_prefetch=0,
            grid=(n_hw, N),
            in_specs=[pl.BlockSpec((R, 1), lambda t, n: (0, 0))],
            out_specs=pl.BlockSpec((1, R, thw), lambda t, n: (n, 0, t)),
            scratch_shapes=[pltpu.VMEM(scratch_shape, x.dtype)],
        ),
        compiler_params=pltpu.CompilerParams(
            dimension_semantics=("parallel", "arbitrary")),
        cost_estimate=pl.CostEstimate(
            flops=0, transcendentals=0,
            bytes_accessed=N * R * HW * itemsize),
    )(wh_col)

    if hwp != HW:
        out = out[:, :, :HW]      # rare padded path: drop flat-axis padding
    # (N, 4k, H*W) -> (N, 4k, H, W): pure row-major view, identical memory order
    # to torch.stack([xc, yc, w, h], dim=2).view(N, 4*k, H, W).
    return out.reshape(N, R, H, W)


def make_anchors_ref(x, anchors, x0, y0, sx, sy):
    """Pure-JAX reference mirroring the PyTorch forward."""
    N, _, H, W = x.shape
    k = anchors.shape[1]
    xc = (jnp.arange(W, dtype=jnp.float32) * sx + x0).astype(x.dtype)
    yc = (jnp.arange(H, dtype=jnp.float32) * sy + y0).astype(x.dtype)
    xc = jnp.broadcast_to(xc.reshape(1, 1, 1, W), (N, k, H, W))
    yc = jnp.broadcast_to(yc.reshape(1, 1, H, 1), (N, k, H, W))
    w = jnp.broadcast_to(anchors[0].reshape(1, k, 1, 1), (N, k, H, W)).astype(x.dtype)
    h = jnp.broadcast_to(anchors[1].reshape(1, k, 1, 1), (N, k, H, W)).astype(x.dtype)
    return jnp.stack([xc, yc, w, h], axis=2).reshape(N, 4 * k, H, W)


if __name__ == "__main__":
    key = jax.random.PRNGKey(0)
    kx, ka = jax.random.split(key)

    # Module init args (deterministic, synthetic).
    x0, y0 = 0.5, 0.5          # feature-map origin in image coords
    sx, sy = 8.0, 8.0          # stride per feature-map cell
    k = 3                      # anchors per location
    anchors = jnp.abs(jax.random.normal(ka, (2, k), dtype=jnp.float32)) * 32.0 + 16.0
    # TODO(synk): tunable_anchors only changes Parameter-ness; forward is identical.

    # Forward input: NCHW, only shape/dtype used.
    x = jax.random.normal(kx, (2, 4, 16, 16), dtype=jnp.float32)

    out = make_anchors(x, anchors, x0, y0, sx, sy)
    out = jax.block_until_ready(out)

    ref = make_anchors_ref(x, anchors, x0, y0, sx, sy)
    assert out.shape == (2, 4 * k, 16, 16), out.shape
    assert out.dtype == x.dtype
    assert jnp.allclose(out, ref, atol=1e-6, rtol=1e-6), "mismatch vs reference"

    print("KERNEL_OK")
</pallas_src>

<mosaic_0001>
module attributes {stable_mosaic.version = 11 : i64} {
  func.func @_make_anchors_kernel(%arg0: i32, %arg1: i32, %arg2: memref<12x1xf32, #tpu.memory_space<vmem>>, %arg3: memref<1x12x128xf32, #tpu.memory_space<vmem>>, %arg4: memref<12x128xf32, #tpu.memory_space<vmem>>) attributes {dimension_semantics = [#tpu.dimension_semantics<parallel>, #tpu.dimension_semantics<arbitrary>], iteration_bounds = array<i64: 2, 2>, scalar_prefetch = 0 : i64, scratch_operands = 1 : i64, tpu.core_type = #tpu.core_type<tc>, window_params = [{pipeline_mode = #tpu.pipeline_mode<synchronous>, transform_indices = @transform_0, window_bounds = array<i64: 12, 1>}, {transform_indices = @transform_1, window_bounds = array<i64: 1, 12, 128>}]} {
    %c0_i32 = arith.constant 0 : i32
    %0 = arith.cmpi eq, %arg1, %c0_i32 : i32
    %1 = arith.extui %0 : i1 to i32
    %c0_i32_0 = arith.constant 0 : i32
    %2 = arith.cmpi ne, %1, %c0_i32_0 : i32
    scf.if %2 {
      %6 = tpu.iota {dimensions = array<i32: 1>} : vector<1x128xi32>
      %c4_i32 = arith.constant 4 : i32
      %7 = vector.broadcast %c4_i32 : i32 to vector<1x128xi32>
      %8 = arith.shrsi %6, %7 : vector<1x128xi32>
      %c15_i32 = arith.constant 15 : i32
      %9 = vector.broadcast %c15_i32 : i32 to vector<1x128xi32>
      %10 = arith.andi %6, %9 : vector<1x128xi32>
      %c8_i32 = arith.constant 8 : i32
      %11 = arith.muli %arg0, %c8_i32 : i32
      %12 = vector.broadcast %11 : i32 to vector<1x128xi32>
      %13 = arith.addi %8, %12 : vector<1x128xi32>
      %14 = arith.sitofp %10 : vector<1x128xi32> to vector<1x128xf32>
      %cst = arith.constant 8.000000e+00 : f32
      %15 = vector.broadcast %cst : f32 to vector<1x128xf32>
      %16 = arith.mulf %14, %15 : vector<1x128xf32>
      %cst_3 = arith.constant 5.000000e-01 : f32
      %17 = vector.broadcast %cst_3 : f32 to vector<1x128xf32>
      %18 = arith.addf %16, %17 : vector<1x128xf32>
      %19 = arith.sitofp %13 : vector<1x128xi32> to vector<1x128xf32>
      %cst_4 = arith.constant 8.000000e+00 : f32
      %20 = vector.broadcast %cst_4 : f32 to vector<1x128xf32>
      %21 = arith.mulf %19, %20 : vector<1x128xf32>
      %cst_5 = arith.constant 5.000000e-01 : f32
      %22 = vector.broadcast %cst_5 : f32 to vector<1x128xf32>
      %23 = arith.addf %21, %22 : vector<1x128xf32>
      %24 = tpu.iota {dimensions = array<i32: 0>} : vector<12x1xi32>
      %c3_i32 = arith.constant 3 : i32
      %25 = vector.broadcast %c3_i32 : i32 to vector<12x1xi32>
      %26 = arith.andi %24, %25 : vector<12x1xi32>
      %c0_i32_6 = arith.constant 0 : i32
      %27 = vector.broadcast %c0_i32_6 : i32 to vector<12x1xi32>
      %28 = arith.cmpi eq, %26, %27 : vector<12x1xi32>
      %c1_i32 = arith.constant 1 : i32
      %29 = vector.broadcast %c1_i32 : i32 to vector<12x1xi32>
      %30 = arith.cmpi eq, %26, %29 : vector<12x1xi32>
      %c0 = arith.constant 0 : index
      %c0_7 = arith.constant 0 : index
      %31 = vector.load %arg2[%c0, %c0_7] : memref<12x1xf32, #tpu.memory_space<vmem>>, vector<12x1xf32>
      %32 = vector.shape_cast %30 : vector<12x1xi1> to vector<12x1xi1>
      %33 = vector.broadcast %32 : vector<12x1xi1> to vector<12x128xi1>
      %34 = vector.shape_cast %23 : vector<1x128xf32> to vector<1x128xf32>
      %35 = vector.broadcast %34 : vector<1x128xf32> to vector<12x128xf32>
      %36 = vector.shape_cast %31 : vector<12x1xf32> to vector<12x1xf32>
      %37 = vector.broadcast %36 : vector<12x1xf32> to vector<12x128xf32>
      %38 = arith.select %33, %35, %37 : vector<12x128xi1>, vector<12x128xf32>
      %39 = vector.shape_cast %28 : vector<12x1xi1> to vector<12x1xi1>
      %40 = vector.broadcast %39 : vector<12x1xi1> to vector<12x128xi1>
      %41 = vector.shape_cast %18 : vector<1x128xf32> to vector<1x128xf32>
      %42 = vector.broadcast %41 : vector<1x128xf32> to vector<12x128xf32>
      %43 = arith.select %40, %42, %38 : vector<12x128xi1>, vector<12x128xf32>
      %c0_8 = arith.constant 0 : index
      %c0_9 = arith.constant 0 : index
      %c0_10 = arith.constant 0 : index
      %44 = vector.load %arg3[%c0_8, %c0_9, %c0_10] : memref<1x12x128xf32, #tpu.memory_space<vmem>>, vector<1x12x128xf32>
      %45 = vector.shape_cast %44 : vector<1x12x128xf32> to vector<12x128xf32>
      %46 = vector.shape_cast %43 : vector<12x128xf32> to vector<1x12x128xf32>
      tpu.vector_store %arg3[%c0_8, %c0_9, %c0_10], %46 {strides = array<i32>} : memref<1x12x128xf32, #tpu.memory_space<vmem>>, vector<1x12x128xf32>,
      %c0_11 = arith.constant 0 : index
      %c0_12 = arith.constant 0 : index
      %47 = vector.load %arg4[%c0_11, %c0_12] : memref<12x128xf32, #tpu.memory_space<vmem>>, vector<12x128xf32>
      tpu.vector_store %arg4[%c0_11, %c0_12], %43 {strides = array<i32>} : memref<12x128xf32, #tpu.memory_space<vmem>>, vector<12x128xf32>,
    } else {
    }
    %c0_i32_1 = arith.constant 0 : i32
    %3 = arith.cmpi sgt, %arg1, %c0_i32_1 : i32
    %4 = arith.extui %3 : i1 to i32
    %c0_i32_2 = arith.constant 0 : i32
    %5 = arith.cmpi ne, %4, %c0_i32_2 : i32
    scf.if %5 {
      %c0 = arith.constant 0 : index
      %c0_3 = arith.constant 0 : index
      %6 = vector.load %arg4[%c0, %c0_3] : memref<12x128xf32, #tpu.memory_space<vmem>>, vector<12x128xf32>
      %c0_4 = arith.constant 0 : index
      %c0_5 = arith.constant 0 : index
      %c0_6 = arith.constant 0 : index
      %7 = vector.load %arg3[%c0_4, %c0_5, %c0_6] : memref<1x12x128xf32, #tpu.memory_space<vmem>>, vector<1x12x128xf32>
      %8 = vector.shape_cast %7 : vector<1x12x128xf32> to vector<12x128xf32>
      %9 = vector.shape_cast %6 : vector<12x128xf32> to vector<1x12x128xf32>
      tpu.vector_store %arg3[%c0_4, %c0_5, %c0_6], %9 {strides = array<i32>} : memref<1x12x128xf32, #tpu.memory_space<vmem>>, vector<1x12x128xf32>,
    } else {
    }
    return
  }
  func.func @transform_0(%arg0: i32, %arg1: i32) -> (i32, i32) {
    %c0_i32 = arith.constant 0 : i32
    %c0_i32_0 = arith.constant 0 : i32
    %c0_i32_1 = arith.constant 0 : i32
    return %c0_i32, %c0_i32_0 : i32, i32
  }
  func.func @transform_1(%arg0: i32, %arg1: i32) -> (i32, i32, i32) {
    %c0_i32 = arith.constant 0 : i32
    %c0_i32_0 = arith.constant 0 : i32
    return %arg1, %c0_i32, %arg0 : i32, i32, i32
  }
}

</mosaic_0001>

<llo_original>
// kernel: tpu_custom_call.1
$region0: #{tpu_custom_call.1}
  #allocation0 [shape = 'u32[]', space=smem, size = 0x4, offset = 0x4, fixed_abs, tag = 'smem constant byte address 0x4 - core index']
  #allocation1 [shape = 'u32[144,128]{1,0:T(1,128)}', space=vmem, size = 0x12000, scoped, tag = 'internal scratch']
  #allocation2 [shape = 'f32[12,128]{1,0:T(8,128)}', space=vmem, size = 0x2000, scoped, tag = 'scratch operand']
  %s0 = inlined_call_operand.vmem [shape: f32[12,1], index: 0, kind: input, shape index: {}]
  %s1 = inlined_call_operand.vmem [shape: f32[2,12,256], index: 1, kind: output, shape index: {}]
  %s2 = sld [smem:[#allocation0]]
  $region79: #{tpu_custom_call.1} parent=0
    _
  %s4 = ssub.s32 1, %s2
  %s5 = scalar_select 0, %s4, %s2
  $region1: #{tpu_custom_call.1} parent=0
    #allocation3 [shape = 'u8[16384]{0}', space=vmem, size = 0x4000, scoped, tag = 'output window, operand 0']
    loop: start=0, step=1, limit=6
    $region2: #{tpu_custom_call.1} parent=1 // loop_pre_header
      _
    $region3: #{tpu_custom_call.1} parent=1 // loop_header
      %s7 = sphi 0, %s11
      %p8 = scmp.ge.s32.totalorder %s7, 6
      %s14 = sphi 0, %s26
      %s15 = sphi 0, %s22
      %s16 = sphi 0, %s14
      %s17 = sphi 0, %s15
      %s18 = sphi 0, %s16
      %s19 = sphi 0, %s17
      %s27 = sphi 0, %s27
      %s29 = sphi 0, %s27
      %s30 = sphi 0, %s29
      %s44 = sphi 0, %s30
      %s52 = sphi 0, %s54
      %s55 = sphi 0, %s52
      %s56 = sphi 0, %s55
      %s72 = sphi 0, %s56
    $region4: #{tpu_custom_call.1} parent=1 // loop_header_branch
      %10 = sbr.rel (%p8) target = $region8
    $region5: #{tpu_custom_call.1} parent=1 // loop_body
      %s12 = ssub.s32 %s7, 1
      %s13 = ssub.s32 %s7, 2
      %s20 = sadd.s32 1, %s15
      %p21 = scmp.ge.s32.totalorder %s20, 2
      %s22 = scalar_select %p21, 0, %s20
      %s23 = sadd.s32 1, %s14
      %s24 = scalar_select %p21, %s23, %s14
      %p25 = scmp.ge.s32.totalorder %s24, 2
      %s26 = scalar_select %p25, 0, %s24
      %s28 = sadd.s32 %s27, 1
      %p31 = scmp.eq.s32.totalorder %s7, 3
      %p32 = scmp.ne.s32.totalorder %s27, %s29
      %p33 = scmp.eq.s32.totalorder %s7, 0
      %p34 = por %p32, %p33
      %p35 = scmp.ne.s32.totalorder %s27, %s29
      %p36 = scmp.eq.s32.totalorder %s12, 3
      %p37 = por %p35, %p36
      %p38 = scmp.ne.s32.totalorder %s29, %s30
      %p39 = scmp.eq.s32.totalorder %s12, 0
      %p40 = por %p38, %p39
      %p41 = scmp.ne.s32.totalorder %s29, %s30
      %p42 = scmp.eq.s32.totalorder %s13, 3
      %p43 = por %p41, %p42
      %p45 = scmp.ne.s32.totalorder %s30, %s44
      %p46 = scmp.eq.s32.totalorder %s13, 0
      %p47 = por %p45, %p46
      %s48 = ssub.s32 %s15, %s22
      %s49 = ssub.s32 %s14, %s26
      %s50 = sor.u32 %s48, %s49
      %p51 = scmp.eq.s32.totalorder %s50, 0
      %s53 = sadd.s32 %s52, 1
      %s54 = scalar_select %p51, %s52, %s53
      %p57 = pneg %p51
      %p58 = scmp.eq.s32.totalorder %s7, 3
      %p59 = por %p57, %p58
      %p60 = scmp.ne.s32.totalorder %s52, %s55
      %p61 = scmp.eq.s32.totalorder %s7, 0
      %p62 = por %p60, %p61
      %p63 = scmp.ne.s32.totalorder %s52, %s55
      %p64 = scmp.eq.s32.totalorder %s12, 3
      %p65 = por %p63, %p64
      %p66 = scmp.ne.s32.totalorder %s55, %s56
      %p67 = scmp.eq.s32.totalorder %s12, 0
      %p68 = por %p66, %p67
      %p69 = scmp.ne.s32.totalorder %s55, %s56
      %p70 = scmp.eq.s32.totalorder %s13, 3
      %p71 = por %p69, %p70
      %p73 = scmp.ne.s32.totalorder %s56, %s72
      %p74 = scmp.eq.s32.totalorder %s13, 0
      %p75 = por %p73, %p74
      %p76 = scmp.le.s32.totalorder 1, %s7
      %p77 = scmp.lt.s32.totalorder %s7, 5
      %p78 = pnand %p76, %p77
      %p79 = pneg %p78
      // Predicated region
      $region9: #{tpu_custom_call.1} parent=5 // pred_check
        _
      $region10: #{tpu_custom_call.1} parent=5 // pred_check_branch
        %81 = sbr.rel (%p78) target = $region12
      $region11: #{tpu_custom_call.1} parent=5 // pred_region
        %s82 = ssub.s32 %s7, 1
        // Predicated region
        $region13: #{tpu_custom_call.1} parent=11 // pred_check
          %p83 = pneg %p40
        $region14: #{tpu_custom_call.1} parent=11 // pred_check_branch
          %85 = sbr.rel (%p83) target = $region16
        $region15: #{tpu_custom_call.1} parent=11 // pred_region
          _
        $region16: #{tpu_custom_call.1} parent=11 // pred_fallthru
          _
      $region12: #{tpu_custom_call.1} parent=5 // pred_fallthru
        _
      %p86 = scmp.lt.s32.totalorder %s7, 4
      // Predicated region
      $region17: #{tpu_custom_call.1} parent=5 // pred_check
        %p87 = pneg %p86
      $region18: #{tpu_custom_call.1} parent=5 // pred_check_branch
        %89 = sbr.rel (%p87) target = $region20
      $region19: #{tpu_custom_call.1} parent=5 // pred_region
        _
      $region20: #{tpu_custom_call.1} parent=5 // pred_fallthru
        _
      %p90 = scmp.le.s32.totalorder 1, %s7
      %p91 = scmp.lt.s32.totalorder %s7, 5
      %p92 = pnand %p90, %p91
      %p93 = pneg %p92
      // Predicated region
      $region21: #{tpu_custom_call.1} parent=5 // pred_check
        _
      $region22: #{tpu_custom_call.1} parent=5 // pred_check_branch
        %95 = sbr.rel (%p92) target = $region24
      $region23: #{tpu_custom_call.1} parent=5 // pred_region
        %s96 = ssub.s32 %s7, 1
        %p97 = pneg %p40
        %p98 = pneg %p37
        %p99 = pneg %p68
        %p100 = pneg %p65
        %s101 = sand.u32 %s55, 1
        %s102 = sand.u32 %s55, 1
        %s103 = smul.addr %s102, 16
        %s104 = scalar_lea.vmem [#allocation3], %s103
        %p105 = scmp.eq.s32.totalorder %s17, 0
        // Predicated region
        $region25: #{tpu_custom_call.1} parent=23 // pred_check
          %p106 = pneg %p105
        $region26: #{tpu_custom_call.1} parent=23 // pred_check_branch
          %108 = sbr.rel (%p106) target = $region28
        $region27: #{tpu_custom_call.1} parent=23 // pred_region
          %v109 = vlaneseq
          %v110 = vand.u32 %v109, 127
          %v111 = vshra.s32 %v110, 4
          %v112 = vand.u32 %v110, 15
          %s113 = smul.u32 %s16, 8
          %v114 = vstv %s113
          %v115 = vadd.s32 %v111, %v114
          %v116 = vcvt.s32.f32 %v112
          %v117 = vmul.f32 %v116, 8.0
          %v118 = vadd.f32 %v117, 0.5
          %v119 = vcvt.s32.f32 %v115
          %v120 = vmul.f32 %v119, 8.0
          %v121 = vadd.f32 %v120, 0.5
          %v122 = vlaneseq
          %v123 = vshrl.u32 %v122, 7
          %v124 = vadd.s32 %v123, 8
          %v125 = vand.u32 %v123, 3
          %v126 = vand.u32 %v124, 3
          %vm127 = vcmp.eq.s32.totalorder %v125, 0
          %vm128 = vcmp.eq.s32.totalorder %v126, 0
          %vm129 = vcmp.eq.s32.totalorder %v125, 1
          %vm130 = vcmp.eq.s32.totalorder %v126, 1
          %v131 = vld [vmem:[%s0] sm:$0xff]
          %v132 = vld [vmem:[%s0 + $0x8] sm:$0xf]
          %v133 = vsel %vm129, 1, 0
          %v134 = vsel %vm130, 1, 0
          %vm135 = vcmp.eq.s32.totalorder %v133, 1
          %vm136 = vcmp.eq.s32.totalorder %v134, 1
          %138 = vset.pattern.permute.xlu0 0
          %139 = vperm.xlu0 %138, %v131
          %v140 = vpop.permute.xlu0 %139
          %143 = vset.pattern.permute.xlu0 0
          %144 = vperm.xlu0 %143, %v132
          %v145 = vpop.permute.xlu0 %144
          %v147 = vsel %vm135, %v121, %v140
          %v148 = vsel %vm136, %v121, %v145
          %v149 = vsel %vm127, 1, 0
          %v150 = vsel %vm128, 1, 0
          %vm151 = vcmp.eq.s32.totalorder %v149, 1
          %vm152 = vcmp.eq.s32.totalorder %v150, 1
          %v153 = vsel %vm151, %v118, %v147
          %v154 = vsel %vm152, %v118, %v148
          %155 = vst [vmem:[%s104] sm:$0xff] %v153
          %156 = vst [vmem:[%s104 + $0x8] sm:$0xf] %v154
          %157 = vst [vmem:[#allocation2] sm:$0xff] %v153
          %158 = vst [vmem:[#allocation2 + $0x8] sm:$0xf] %v154
        $region28: #{tpu_custom_call.1} parent=23 // pred_fallthru
          _
        %p159 = scmp.gt.s32.totalorder %s17, 0
        // Predicated region
        $region29: #{tpu_custom_call.1} parent=23 // pred_check
          %p160 = pneg %p159
        $region30: #{tpu_custom_call.1} parent=23 // pred_check_branch
          %162 = sbr.rel (%p160) target = $region32
        $region31: #{tpu_custom_call.1} parent=23 // pred_region
          %v163 = vld [vmem:[#allocation2] sm:$0xff]
          %v164 = vld [vmem:[#allocation2 + $0x8] sm:$0xf]
          %165 = vst [vmem:[%s104] sm:$0xff] %v163
          %166 = vst [vmem:[%s104 + $0x8] sm:$0xf] %v164
        $region32: #{tpu_custom_call.1} parent=23 // pred_fallthru
          _
        %s167 = sand.u32 %s55, 1
        %s168 = sand.u32 %s55, 1
        %s169 = smul.addr %s168, 16
        %s170 = scalar_lea.vmem [#allocation3], %s169
        // Predicated region
        $region33: #{tpu_custom_call.1} parent=23 // pred_check
          %p171 = pneg %p65
        $region34: #{tpu_custom_call.1} parent=23 // pred_check_branch
          %173 = sbr.rel (%p171) target = $region36
        $region35: #{tpu_custom_call.1} parent=23 // pred_region
          %s174 = smul.addr %s17, 4
          %s175 = sadd.s32 %s16, %s174
          %s176 = smul.addr %s175, 8
          %s177 = scalar_lea.vmem %s1, %s176
          // Predicated region
          $region37: #{tpu_custom_call.1} parent=35 // pred_check
            _
          $region38: #{tpu_custom_call.1} parent=35 // pred_check_branch
            %179 = sbr.rel (0) target = $region40
          $region39: #{tpu_custom_call.1} parent=35 // pred_region
            // Predicated region
            $region41: #{tpu_custom_call.1} parent=39 // pred_check
              _
            $region42: #{tpu_custom_call.1} parent=39 // pred_check_branch
              %181 = sbr.rel (0) target = $region44
            $region43: #{tpu_custom_call.1} parent=39 // pred_region
              // Predicated region
              $region56: #{tpu_custom_call.1} parent=43 // pred_check
                _
              $region57: #{tpu_custom_call.1} parent=43 // pred_check_branch
                %199 = sbr.rel (0) target = $region59
              $region58: #{tpu_custom_call.1} parent=43 // pred_region
                loop: start=0, step=1, limit=1
                $region60: #{tpu_custom_call.1} parent=58 // loop_pre_header
                  _
                $region61: #{tpu_custom_call.1} parent=58 // loop_header
                  %s201 = sphi 0, %s205
                  %p202 = scmp.ge.s32.totalorder %s201, 1
                  %s206 = sphi %s170, %s170
                  %s207 = sphi %s177, %s177
                $region62: #{tpu_custom_call.1} parent=58 // loop_header_branch
                  %204 = sbr.rel (%p202) target = $region66
                $region63: #{tpu_custom_call.1} parent=58 // loop_body
                  %v208 = vld [vmem:[%s206] sm:$0xff]
                  %209 = vst [vmem:[%s207] sm:$0xff] %v208
                  %v210 = vld [vmem:[%s206 + $0x8] sm:$0xff]
                  %211 = vst [vmem:[%s207 + $0x10] sm:$0xff] %v210
                $region64: #{tpu_custom_call.1} parent=58 // loop_footer
                  %s205 = sadd.s32 1, %s201
                $region65: #{tpu_custom_call.1} parent=58 // loop_footer_branch
                  %200 = sbr.rel target = $region61
                $region66: #{tpu_custom_call.1} parent=58 // loop_exit
                  _
              $region59: #{tpu_custom_call.1} parent=43 // pred_fallthru
                _
              // Predicated region
              $region67: #{tpu_custom_call.1} parent=43 // pred_check
                _
              $region68: #{tpu_custom_call.1} parent=43 // pred_check_branch
                %213 = sbr.rel target = $region70
              $region69: #{tpu_custom_call.1} parent=43 // pred_region
                _
              $region70: #{tpu_custom_call.1} parent=43 // pred_fallthru
                _
            $region44: #{tpu_custom_call.1} parent=39 // pred_fallthru
              _
            // Predicated region
            $region45: #{tpu_custom_call.1} parent=39 // pred_check
              _
            $region46: #{tpu_custom_call.1} parent=39 // pred_check_branch
              %183 = sbr.rel target = $region48
            $region47: #{tpu_custom_call.1} parent=39 // pred_region
              %s185 = ssub.s32 256, 1
              loop: start=0, step=1, limit=1
              $region49: #{tpu_custom_call.1} parent=47 // loop_pre_header
                _
              $region50: #{tpu_custom_call.1} parent=47 // loop_header
                %s187 = sphi 0, %s191
                %p188 = scmp.ge.s32.totalorder %s187, 1
                %s192 = sphi %s170, %s170
                %s193 = sphi %s177, %s177
              $region51: #{tpu_custom_call.1} parent=47 // loop_header_branch
                %190 = sbr.rel (%p188) target = $region55
              $region52: #{tpu_custom_call.1} parent=47 // loop_body
                %v194 = vld [vmem:[%s192] sm:%s185]
                %195 = vst [vmem:[%s193] sm:%s185] %v194
                %v196 = vld [vmem:[%s192 + $0x8] sm:%s185]
                %197 = vst [vmem:[%s193 + $0x10] sm:%s185] %v196
              $region53: #{tpu_custom_call.1} parent=47 // loop_footer
                %s191 = sadd.s32 1, %s187
              $region54: #{tpu_custom_call.1} parent=47 // loop_footer_branch
                %186 = sbr.rel target = $region50
              $region55: #{tpu_custom_call.1} parent=47 // loop_exit
                _
            $region48: #{tpu_custom_call.1} parent=39 // pred_fallthru
              _
          $region40: #{tpu_custom_call.1} parent=35 // pred_fallthru
            _
          %214 = vnop
        $region36: #{tpu_custom_call.1} parent=23 // pred_fallthru
          _
      $region24: #{tpu_custom_call.1} parent=5 // pred_fallthru
        _
      %p215 = scmp.le.s32.totalorder 2, %s7
      // Predicated region
      $region71: #{tpu_custom_call.1} parent=5 // pred_check
        %p216 = pneg %p215
      $region72: #{tpu_custom_call.1} parent=5 // pred_check_branch
        %218 = sbr.rel (%p216) target = $region74
      $region73: #{tpu_custom_call.1} parent=5 // pred_region
        %s219 = ssub.s32 %s7, 2
        // Predicated region
        $region75: #{tpu_custom_call.1} parent=73 // pred_check
          %p220 = pneg %p71
        $region76: #{tpu_custom_call.1} parent=73 // pred_check_branch
          %222 = sbr.rel (%p220) target = $region78
        $region77: #{tpu_custom_call.1} parent=73 // pred_region
          %s223 = sand.u32 %s56, 1
          %s224 = sand.u32 %s56, 1
          %s225 = smul.addr %s224, 16
          %s226 = scalar_lea.vmem [#allocation3], %s225
        $region78: #{tpu_custom_call.1} parent=73 // pred_fallthru
          _
      $region74: #{tpu_custom_call.1} parent=5 // pred_fallthru
        _
    $region6: #{tpu_custom_call.1} parent=1 // loop_footer
      %s11 = sadd.s32 1, %s7
    $region7: #{tpu_custom_call.1} parent=1 // loop_footer_branch
      %6 = sbr.rel target = $region3
    $region8: #{tpu_custom_call.1} parent=1 // loop_exit
      _

</llo_original>
